<compile_context>
chip_gen: v7x
topology: tpu7x:2x2x1
jax: 0.10.0
libtpu: 0.0.40
codegen_flags: <defaults>
</compile_context>

<pallas_src>
import jax
import jax.numpy as jnp
from jax.experimental import pallas as pl
from jax.experimental.pallas import tpu as pltpu

POOL_SIZES = (5, 9, 13)        # module default; kernel exploits 9 = 5∘5, 13 = 5∘5∘5
_SHIFTS = (-2, -1, 1, 2)       # neighbour offsets of the 5-wide separable window


def _pool5_flat(x, w_masks, h_masks, H, W):
    """Exact 5x5, stride-1, pad-2 (-inf) max pool on a channels-major tile.

    x: (Ct, H*W) with the flattened spatial index on the lane axis.
    w_masks[d] / h_masks[d]: (1, H*W) booleans, True where the neighbour at column /
    row offset d exists (handles image borders AND the row wrap of the flattened
    layout).  Separable: columns first, then rows.
    """
    hw = x.shape[-1]
    # Columns: neighbour (h, w+d) lives at flat offset +d.
    r = x
    for d in _SHIFTS:
        if not (-W < d < W):               # neighbour column can never exist
            continue
        shifted = pltpu.roll(x, shift=(-d) % hw, axis=1)   # shifted[i] = x[(i+d) % hw]
        r = jnp.where(w_masks[d], jnp.maximum(r, shifted), r)
    # Rows: neighbour (h+d, w) lives at flat offset +d*W.
    out = r
    for d in _SHIFTS:
        if not (-H < d < H):               # neighbour row can never exist
            continue
        shifted = pltpu.roll(r, shift=(-d * W) % hw, axis=1)
        out = jnp.where(h_masks[d], jnp.maximum(out, shifted), out)
    return out


def _make_spp_kernel(H, W):
    def kernel(idx_ref, x_ref, o_ref):
        # idx_ref: (2, H*W) int32 -- row 0: w index, row 1: h index of each flat pos.
        # x_ref:   (1, Ct, H*W)   -- one batch element, one channel tile.
        # o_ref:   (1, 4, Ct, H*W) -- groups [pool13, pool9, pool5, identity].
        x = x_ref[0]
        w_idx = idx_ref[0:1, :]
        h_idx = idx_ref[1:2, :]
        w_masks = {}
        h_masks = {}
        for d in _SHIFTS:
            wd = w_idx + d
            hd = h_idx + d
            w_masks[d] = (wd >= 0) & (wd < W)
            h_masks[d] = (hd >= 0) & (hd < H)

        o_ref[0, 3] = x                                        # identity branch
        p5 = _pool5_flat(x, w_masks, h_masks, H, W)            # k = 5
        o_ref[0, 2] = p5
        p9 = _pool5_flat(p5, w_masks, h_masks, H, W)           # == k = 9  (SPPF)
        o_ref[0, 1] = p9
        o_ref[0, 0] = _pool5_flat(p9, w_masks, h_masks, H, W)  # == k = 13 (SPPF)
    return kernel


def _pick_channel_tile(C, HW, itemsize):
    """Channel tile: multiple of 8 dividing C (else full C), sized so the
    double-buffered working set (1 input + 4 output slabs) stays a few MiB."""
    if C % 8 != 0:
        return C
    budget = 4 * 1024 * 1024
    tc = C
    while tc > 8 and (2 * 5 * tc * HW * itemsize > budget or tc > 256):
        half = tc // 2
        if half % 8 == 0 and C % half == 0:
            tc = half
        else:
            break
    return tc


def spatial_pyramid_pooling(x):
    """x: (N, C, H, W) -> (N, 4*C, H, W); identical to the PyTorch module forward."""
    N, C, H, W = x.shape
    HW = H * W
    itemsize = jnp.dtype(x.dtype).itemsize
    tc = _pick_channel_tile(C, HW, itemsize)
    n_ct = C // tc

    x_flat = x.reshape(N, C, HW)                               # free (contiguous)

    flat = jnp.arange(HW, dtype=jnp.int32)
    idx = jnp.stack([flat % W, flat // W], axis=0)             # (2, HW): [w_idx, h_idx]

    work_bytes = 2 * 5 * tc * HW * itemsize + 4 * 2 * HW * 4
    vmem_limit = int(min(max(2 * work_bytes, 32 * 1024 * 1024), 128 * 1024 * 1024))

    cost = pl.CostEstimate(
        flops=3 * 8 * N * C * HW,                              # 3 pools x 8 maxima/elem
        transcendentals=0,
        bytes_accessed=5 * N * C * HW * itemsize,              # read 1x, write 4x
    )

    out = pl.pallas_call(
        _make_spp_kernel(H, W),
        out_shape=jax.ShapeDtypeStruct((N, 4, C, HW), x.dtype),
        grid=(N, n_ct),
        in_specs=[
            pl.BlockSpec((2, HW), lambda n, c: (0, 0)),
            pl.BlockSpec((1, tc, HW), lambda n, c: (n, c, 0)),
        ],
        out_specs=pl.BlockSpec((1, 4, tc, HW), lambda n, c: (n, 0, c, 0)),
        compiler_params=pltpu.CompilerParams(
            dimension_semantics=("parallel", "parallel"),
            vmem_limit_bytes=vmem_limit),
        cost_estimate=cost,
    )(idx, x_flat)

    # (N, 4, C, HW) -> (N, 4C, H, W): contiguous reshape; channel order is
    # [pool13 | pool9 | pool5 | x], exactly like torch.cat(..., dim=1).
    return out.reshape(N, 4 * C, H, W)


def spp_reference(x):
    """Pure-JAX reference matching the PyTorch forward (NCHW)."""
    def mp(v, k):
        p = k // 2
        return jax.lax.reduce_window(
            v, -jnp.inf, jax.lax.max,
            window_dimensions=(1, 1, k, k),
            window_strides=(1, 1, 1, 1),
            padding=((0, 0), (0, 0), (p, p), (p, p)))
    feats = [mp(x, k) for k in reversed(POOL_SIZES)] + [x]
    return jnp.concatenate(feats, axis=1)


if __name__ == "__main__":
    key = jax.random.PRNGKey(0)
    x = jax.random.normal(key, (2, 4, 16, 16), dtype=jnp.float32)

    out = jax.block_until_ready(jax.jit(spatial_pyramid_pooling)(x))

    ref = spp_reference(x)
    assert out.shape == (2, 16, 16, 16), out.shape
    assert jnp.allclose(out, ref, atol=1e-6, rtol=1e-6), "mismatch vs reference"
    print("KERNEL_OK")
</pallas_src>

<mosaic_0001>
module attributes {stable_mosaic.version = 11 : i64} {
  func.func @kernel(%arg0: i32, %arg1: i32, %arg2: memref<2x256xi32, #tpu.memory_space<vmem>>, %arg3: memref<1x4x256xf32, #tpu.memory_space<vmem>>, %arg4: memref<1x4x4x256xf32, #tpu.memory_space<vmem>>) attributes {dimension_semantics = [#tpu.dimension_semantics<parallel>, #tpu.dimension_semantics<parallel>], iteration_bounds = array<i64: 2, 1>, scalar_prefetch = 0 : i64, scratch_operands = 0 : i64, tpu.core_type = #tpu.core_type<tc>, window_params = [{pipeline_mode = #tpu.pipeline_mode<synchronous>, transform_indices = @transform_0, window_bounds = array<i64: 2, 256>}, {transform_indices = @transform_1, window_bounds = array<i64: 1, 4, 256>}, {transform_indices = @transform_2, window_bounds = array<i64: 1, 4, 4, 256>}]} {
    %c0 = arith.constant 0 : index
    %c0_0 = arith.constant 0 : index
    %c0_1 = arith.constant 0 : index
    %0 = vector.load %arg3[%c0, %c0_0, %c0_1] : memref<1x4x256xf32, #tpu.memory_space<vmem>>, vector<1x4x256xf32>
    %1 = vector.shape_cast %0 : vector<1x4x256xf32> to vector<4x256xf32>
    %c0_2 = arith.constant 0 : index
    %c0_3 = arith.constant 0 : index
    %2 = vector.load %arg2[%c0_2, %c0_3] : memref<2x256xi32, #tpu.memory_space<vmem>>, vector<1x256xi32>
    %c1 = arith.constant 1 : index
    %c0_4 = arith.constant 0 : index
    %3 = vector.load %arg2[%c1, %c0_4] : memref<2x256xi32, #tpu.memory_space<vmem>>, vector<1x256xi32>
    %c-2_i32 = arith.constant -2 : i32
    %4 = vector.broadcast %c-2_i32 : i32 to vector<1x256xi32>
    %5 = arith.addi %2, %4 : vector<1x256xi32>
    %c-2_i32_5 = arith.constant -2 : i32
    %6 = vector.broadcast %c-2_i32_5 : i32 to vector<1x256xi32>
    %7 = arith.addi %3, %6 : vector<1x256xi32>
    %c0_i32 = arith.constant 0 : i32
    %8 = vector.broadcast %c0_i32 : i32 to vector<1x256xi32>
    %9 = arith.cmpi sge, %5, %8 : vector<1x256xi32>
    %c16_i32 = arith.constant 16 : i32
    %10 = vector.broadcast %c16_i32 : i32 to vector<1x256xi32>
    %11 = arith.cmpi slt, %5, %10 : vector<1x256xi32>
    %12 = arith.andi %9, %11 : vector<1x256xi1>
    %c0_i32_6 = arith.constant 0 : i32
    %13 = vector.broadcast %c0_i32_6 : i32 to vector<1x256xi32>
    %14 = arith.cmpi sge, %7, %13 : vector<1x256xi32>
    %c16_i32_7 = arith.constant 16 : i32
    %15 = vector.broadcast %c16_i32_7 : i32 to vector<1x256xi32>
    %16 = arith.cmpi slt, %7, %15 : vector<1x256xi32>
    %17 = arith.andi %14, %16 : vector<1x256xi1>
    %c-1_i32 = arith.constant -1 : i32
    %18 = vector.broadcast %c-1_i32 : i32 to vector<1x256xi32>
    %19 = arith.addi %2, %18 : vector<1x256xi32>
    %c-1_i32_8 = arith.constant -1 : i32
    %20 = vector.broadcast %c-1_i32_8 : i32 to vector<1x256xi32>
    %21 = arith.addi %3, %20 : vector<1x256xi32>
    %c0_i32_9 = arith.constant 0 : i32
    %22 = vector.broadcast %c0_i32_9 : i32 to vector<1x256xi32>
    %23 = arith.cmpi sge, %19, %22 : vector<1x256xi32>
    %c16_i32_10 = arith.constant 16 : i32
    %24 = vector.broadcast %c16_i32_10 : i32 to vector<1x256xi32>
    %25 = arith.cmpi slt, %19, %24 : vector<1x256xi32>
    %26 = arith.andi %23, %25 : vector<1x256xi1>
    %c0_i32_11 = arith.constant 0 : i32
    %27 = vector.broadcast %c0_i32_11 : i32 to vector<1x256xi32>
    %28 = arith.cmpi sge, %21, %27 : vector<1x256xi32>
    %c16_i32_12 = arith.constant 16 : i32
    %29 = vector.broadcast %c16_i32_12 : i32 to vector<1x256xi32>
    %30 = arith.cmpi slt, %21, %29 : vector<1x256xi32>
    %31 = arith.andi %28, %30 : vector<1x256xi1>
    %c1_i32 = arith.constant 1 : i32
    %32 = vector.broadcast %c1_i32 : i32 to vector<1x256xi32>
    %33 = arith.addi %2, %32 : vector<1x256xi32>
    %c1_i32_13 = arith.constant 1 : i32
    %34 = vector.broadcast %c1_i32_13 : i32 to vector<1x256xi32>
    %35 = arith.addi %3, %34 : vector<1x256xi32>
    %c0_i32_14 = arith.constant 0 : i32
    %36 = vector.broadcast %c0_i32_14 : i32 to vector<1x256xi32>
    %37 = arith.cmpi sge, %33, %36 : vector<1x256xi32>
    %c16_i32_15 = arith.constant 16 : i32
    %38 = vector.broadcast %c16_i32_15 : i32 to vector<1x256xi32>
    %39 = arith.cmpi slt, %33, %38 : vector<1x256xi32>
    %40 = arith.andi %37, %39 : vector<1x256xi1>
    %c0_i32_16 = arith.constant 0 : i32
    %41 = vector.broadcast %c0_i32_16 : i32 to vector<1x256xi32>
    %42 = arith.cmpi sge, %35, %41 : vector<1x256xi32>
    %c16_i32_17 = arith.constant 16 : i32
    %43 = vector.broadcast %c16_i32_17 : i32 to vector<1x256xi32>
    %44 = arith.cmpi slt, %35, %43 : vector<1x256xi32>
    %45 = arith.andi %42, %44 : vector<1x256xi1>
    %c2_i32 = arith.constant 2 : i32
    %46 = vector.broadcast %c2_i32 : i32 to vector<1x256xi32>
    %47 = arith.addi %2, %46 : vector<1x256xi32>
    %c2_i32_18 = arith.constant 2 : i32
    %48 = vector.broadcast %c2_i32_18 : i32 to vector<1x256xi32>
    %49 = arith.addi %3, %48 : vector<1x256xi32>
    %c0_i32_19 = arith.constant 0 : i32
    %50 = vector.broadcast %c0_i32_19 : i32 to vector<1x256xi32>
    %51 = arith.cmpi sge, %47, %50 : vector<1x256xi32>
    %c16_i32_20 = arith.constant 16 : i32
    %52 = vector.broadcast %c16_i32_20 : i32 to vector<1x256xi32>
    %53 = arith.cmpi slt, %47, %52 : vector<1x256xi32>
    %54 = arith.andi %51, %53 : vector<1x256xi1>
    %c0_i32_21 = arith.constant 0 : i32
    %55 = vector.broadcast %c0_i32_21 : i32 to vector<1x256xi32>
    %56 = arith.cmpi sge, %49, %55 : vector<1x256xi32>
    %c16_i32_22 = arith.constant 16 : i32
    %57 = vector.broadcast %c16_i32_22 : i32 to vector<1x256xi32>
    %58 = arith.cmpi slt, %49, %57 : vector<1x256xi32>
    %59 = arith.andi %56, %58 : vector<1x256xi1>
    %c0_23 = arith.constant 0 : index
    %c3 = arith.constant 3 : index
    %c0_24 = arith.constant 0 : index
    %c0_25 = arith.constant 0 : index
    %60 = vector.load %arg4[%c0_23, %c3, %c0_24, %c0_25] : memref<1x4x4x256xf32, #tpu.memory_space<vmem>>, vector<1x1x4x256xf32>
    %61 = vector.shape_cast %60 : vector<1x1x4x256xf32> to vector<4x256xf32>
    %62 = vector.shape_cast %1 : vector<4x256xf32> to vector<1x1x4x256xf32>
    tpu.vector_store %arg4[%c0_23, %c3, %c0_24, %c0_25], %62 {strides = array<i32>} : memref<1x4x4x256xf32, #tpu.memory_space<vmem>>, vector<1x1x4x256xf32>,
    %c2_i32_26 = arith.constant 2 : i32
    %63 = tpu.dynamic_rotate %1 by %c2_i32_26 dim 1 : vector<4x256xf32>, i32 -> vector<4x256xf32>
    %64 = arith.maximumf %1, %63 : vector<4x256xf32>
    %65 = vector.shape_cast %12 : vector<1x256xi1> to vector<1x256xi1>
    %66 = vector.broadcast %65 : vector<1x256xi1> to vector<4x256xi1>
    %67 = arith.select %66, %64, %1 : vector<4x256xi1>, vector<4x256xf32>
    %c1_i32_27 = arith.constant 1 : i32
    %68 = tpu.dynamic_rotate %1 by %c1_i32_27 dim 1 : vector<4x256xf32>, i32 -> vector<4x256xf32>
    %69 = arith.maximumf %67, %68 : vector<4x256xf32>
    %70 = vector.shape_cast %26 : vector<1x256xi1> to vector<1x256xi1>
    %71 = vector.broadcast %70 : vector<1x256xi1> to vector<4x256xi1>
    %72 = arith.select %71, %69, %67 : vector<4x256xi1>, vector<4x256xf32>
    %c255_i32 = arith.constant 255 : i32
    %73 = tpu.dynamic_rotate %1 by %c255_i32 dim 1 : vector<4x256xf32>, i32 -> vector<4x256xf32>
    %74 = arith.maximumf %72, %73 : vector<4x256xf32>
    %75 = vector.shape_cast %40 : vector<1x256xi1> to vector<1x256xi1>
    %76 = vector.broadcast %75 : vector<1x256xi1> to vector<4x256xi1>
    %77 = arith.select %76, %74, %72 : vector<4x256xi1>, vector<4x256xf32>
    %c254_i32 = arith.constant 254 : i32
    %78 = tpu.dynamic_rotate %1 by %c254_i32 dim 1 : vector<4x256xf32>, i32 -> vector<4x256xf32>
    %79 = arith.maximumf %77, %78 : vector<4x256xf32>
    %80 = vector.shape_cast %54 : vector<1x256xi1> to vector<1x256xi1>
    %81 = vector.broadcast %80 : vector<1x256xi1> to vector<4x256xi1>
    %82 = arith.select %81, %79, %77 : vector<4x256xi1>, vector<4x256xf32>
    %c32_i32 = arith.constant 32 : i32
    %83 = tpu.dynamic_rotate %82 by %c32_i32 dim 1 : vector<4x256xf32>, i32 -> vector<4x256xf32>
    %84 = arith.maximumf %82, %83 : vector<4x256xf32>
    %85 = vector.shape_cast %17 : vector<1x256xi1> to vector<1x256xi1>
    %86 = vector.broadcast %85 : vector<1x256xi1> to vector<4x256xi1>
    %87 = arith.select %86, %84, %82 : vector<4x256xi1>, vector<4x256xf32>
    %c16_i32_28 = arith.constant 16 : i32
    %88 = tpu.dynamic_rotate %82 by %c16_i32_28 dim 1 : vector<4x256xf32>, i32 -> vector<4x256xf32>
    %89 = arith.maximumf %87, %88 : vector<4x256xf32>
    %90 = vector.shape_cast %31 : vector<1x256xi1> to vector<1x256xi1>
    %91 = vector.broadcast %90 : vector<1x256xi1> to vector<4x256xi1>
    %92 = arith.select %91, %89, %87 : vector<4x256xi1>, vector<4x256xf32>
    %c240_i32 = arith.constant 240 : i32
    %93 = tpu.dynamic_rotate %82 by %c240_i32 dim 1 : vector<4x256xf32>, i32 -> vector<4x256xf32>
    %94 = arith.maximumf %92, %93 : vector<4x256xf32>
    %95 = vector.shape_cast %45 : vector<1x256xi1> to vector<1x256xi1>
    %96 = vector.broadcast %95 : vector<1x256xi1> to vector<4x256xi1>
    %97 = arith.select %96, %94, %92 : vector<4x256xi1>, vector<4x256xf32>
    %c224_i32 = arith.constant 224 : i32
    %98 = tpu.dynamic_rotate %82 by %c224_i32 dim 1 : vector<4x256xf32>, i32 -> vector<4x256xf32>
    %99 = arith.maximumf %97, %98 : vector<4x256xf32>
    %100 = vector.shape_cast %59 : vector<1x256xi1> to vector<1x256xi1>
    %101 = vector.broadcast %100 : vector<1x256xi1> to vector<4x256xi1>
    %102 = arith.select %101, %99, %97 : vector<4x256xi1>, vector<4x256xf32>
    %c0_29 = arith.constant 0 : index
    %c2 = arith.constant 2 : index
    %c0_30 = arith.constant 0 : index
    %c0_31 = arith.constant 0 : index
    %103 = vector.load %arg4[%c0_29, %c2, %c0_30, %c0_31] : memref<1x4x4x256xf32, #tpu.memory_space<vmem>>, vector<1x1x4x256xf32>
    %104 = vector.shape_cast %103 : vector<1x1x4x256xf32> to vector<4x256xf32>
    %105 = vector.shape_cast %102 : vector<4x256xf32> to vector<1x1x4x256xf32>
    tpu.vector_store %arg4[%c0_29, %c2, %c0_30, %c0_31], %105 {strides = array<i32>} : memref<1x4x4x256xf32, #tpu.memory_space<vmem>>, vector<1x1x4x256xf32>,
    %c2_i32_32 = arith.constant 2 : i32
    %106 = tpu.dynamic_rotate %102 by %c2_i32_32 dim 1 : vector<4x256xf32>, i32 -> vector<4x256xf32>
    %107 = arith.maximumf %102, %106 : vector<4x256xf32>
    %108 = vector.shape_cast %12 : vector<1x256xi1> to vector<1x256xi1>
    %109 = vector.broadcast %108 : vector<1x256xi1> to vector<4x256xi1>
    %110 = arith.select %109, %107, %102 : vector<4x256xi1>, vector<4x256xf32>
    %c1_i32_33 = arith.constant 1 : i32
    %111 = tpu.dynamic_rotate %102 by %c1_i32_33 dim 1 : vector<4x256xf32>, i32 -> vector<4x256xf32>
    %112 = arith.maximumf %110, %111 : vector<4x256xf32>
    %113 = vector.shape_cast %26 : vector<1x256xi1> to vector<1x256xi1>
    %114 = vector.broadcast %113 : vector<1x256xi1> to vector<4x256xi1>
    %115 = arith.select %114, %112, %110 : vector<4x256xi1>, vector<4x256xf32>
    %c255_i32_34 = arith.constant 255 : i32
    %116 = tpu.dynamic_rotate %102 by %c255_i32_34 dim 1 : vector<4x256xf32>, i32 -> vector<4x256xf32>
    %117 = arith.maximumf %115, %116 : vector<4x256xf32>
    %118 = vector.shape_cast %40 : vector<1x256xi1> to vector<1x256xi1>
    %119 = vector.broadcast %118 : vector<1x256xi1> to vector<4x256xi1>
    %120 = arith.select %119, %117, %115 : vector<4x256xi1>, vector<4x256xf32>
    %c254_i32_35 = arith.constant 254 : i32
    %121 = tpu.dynamic_rotate %102 by %c254_i32_35 dim 1 : vector<4x256xf32>, i32 -> vector<4x256xf32>
    %122 = arith.maximumf %120, %121 : vector<4x256xf32>
    %123 = vector.shape_cast %54 : vector<1x256xi1> to vector<1x256xi1>
    %124 = vector.broadcast %123 : vector<1x256xi1> to vector<4x256xi1>
    %125 = arith.select %124, %122, %120 : vector<4x256xi1>, vector<4x256xf32>
    %c32_i32_36 = arith.constant 32 : i32
    %126 = tpu.dynamic_rotate %125 by %c32_i32_36 dim 1 : vector<4x256xf32>, i32 -> vector<4x256xf32>
    %127 = arith.maximumf %125, %126 : vector<4x256xf32>
    %128 = vector.shape_cast %17 : vector<1x256xi1> to vector<1x256xi1>
    %129 = vector.broadcast %128 : vector<1x256xi1> to vector<4x256xi1>
    %130 = arith.select %129, %127, %125 : vector<4x256xi1>, vector<4x256xf32>
    %c16_i32_37 = arith.constant 16 : i32
    %131 = tpu.dynamic_rotate %125 by %c16_i32_37 dim 1 : vector<4x256xf32>, i32 -> vector<4x256xf32>
    %132 = arith.maximumf %130, %131 : vector<4x256xf32>
    %133 = vector.shape_cast %31 : vector<1x256xi1> to vector<1x256xi1>
    %134 = vector.broadcast %133 : vector<1x256xi1> to vector<4x256xi1>
    %135 = arith.select %134, %132, %130 : vector<4x256xi1>, vector<4x256xf32>
    %c240_i32_38 = arith.constant 240 : i32
    %136 = tpu.dynamic_rotate %125 by %c240_i32_38 dim 1 : vector<4x256xf32>, i32 -> vector<4x256xf32>
    %137 = arith.maximumf %135, %136 : vector<4x256xf32>
    %138 = vector.shape_cast %45 : vector<1x256xi1> to vector<1x256xi1>
    %139 = vector.broadcast %138 : vector<1x256xi1> to vector<4x256xi1>
    %140 = arith.select %139, %137, %135 : vector<4x256xi1>, vector<4x256xf32>
    %c224_i32_39 = arith.constant 224 : i32
    %141 = tpu.dynamic_rotate %125 by %c224_i32_39 dim 1 : vector<4x256xf32>, i32 -> vector<4x256xf32>
    %142 = arith.maximumf %140, %141 : vector<4x256xf32>
    %143 = vector.shape_cast %59 : vector<1x256xi1> to vector<1x256xi1>
    %144 = vector.broadcast %143 : vector<1x256xi1> to vector<4x256xi1>
    %145 = arith.select %144, %142, %140 : vector<4x256xi1>, vector<4x256xf32>
    %c0_40 = arith.constant 0 : index
    %c1_41 = arith.constant 1 : index
    %c0_42 = arith.constant 0 : index
    %c0_43 = arith.constant 0 : index
    %146 = vector.load %arg4[%c0_40, %c1_41, %c0_42, %c0_43] : memref<1x4x4x256xf32, #tpu.memory_space<vmem>>, vector<1x1x4x256xf32>
    %147 = vector.shape_cast %146 : vector<1x1x4x256xf32> to vector<4x256xf32>
    %148 = vector.shape_cast %145 : vector<4x256xf32> to vector<1x1x4x256xf32>
    tpu.vector_store %arg4[%c0_40, %c1_41, %c0_42, %c0_43], %148 {strides = array<i32>} : memref<1x4x4x256xf32, #tpu.memory_space<vmem>>, vector<1x1x4x256xf32>,
    %c2_i32_44 = arith.constant 2 : i32
    %149 = tpu.dynamic_rotate %145 by %c2_i32_44 dim 1 : vector<4x256xf32>, i32 -> vector<4x256xf32>
    %150 = arith.maximumf %145, %149 : vector<4x256xf32>
    %151 = vector.shape_cast %12 : vector<1x256xi1> to vector<1x256xi1>
    %152 = vector.broadcast %151 : vector<1x256xi1> to vector<4x256xi1>
    %153 = arith.select %152, %150, %145 : vector<4x256xi1>, vector<4x256xf32>
    %c1_i32_45 = arith.constant 1 : i32
    %154 = tpu.dynamic_rotate %145 by %c1_i32_45 dim 1 : vector<4x256xf32>, i32 -> vector<4x256xf32>
    %155 = arith.maximumf %153, %154 : vector<4x256xf32>
    %156 = vector.shape_cast %26 : vector<1x256xi1> to vector<1x256xi1>
    %157 = vector.broadcast %156 : vector<1x256xi1> to vector<4x256xi1>
    %158 = arith.select %157, %155, %153 : vector<4x256xi1>, vector<4x256xf32>
    %c255_i32_46 = arith.constant 255 : i32
    %159 = tpu.dynamic_rotate %145 by %c255_i32_46 dim 1 : vector<4x256xf32>, i32 -> vector<4x256xf32>
    %160 = arith.maximumf %158, %159 : vector<4x256xf32>
    %161 = vector.shape_cast %40 : vector<1x256xi1> to vector<1x256xi1>
    %162 = vector.broadcast %161 : vector<1x256xi1> to vector<4x256xi1>
    %163 = arith.select %162, %160, %158 : vector<4x256xi1>, vector<4x256xf32>
    %c254_i32_47 = arith.constant 254 : i32
    %164 = tpu.dynamic_rotate %145 by %c254_i32_47 dim 1 : vector<4x256xf32>, i32 -> vector<4x256xf32>
    %165 = arith.maximumf %163, %164 : vector<4x256xf32>
    %166 = vector.shape_cast %54 : vector<1x256xi1> to vector<1x256xi1>
    %167 = vector.broadcast %166 : vector<1x256xi1> to vector<4x256xi1>
    %168 = arith.select %167, %165, %163 : vector<4x256xi1>, vector<4x256xf32>
    %c32_i32_48 = arith.constant 32 : i32
    %169 = tpu.dynamic_rotate %168 by %c32_i32_48 dim 1 : vector<4x256xf32>, i32 -> vector<4x256xf32>
    %170 = arith.maximumf %168, %169 : vector<4x256xf32>
    %171 = vector.shape_cast %17 : vector<1x256xi1> to vector<1x256xi1>
    %172 = vector.broadcast %171 : vector<1x256xi1> to vector<4x256xi1>
    %173 = arith.select %172, %170, %168 : vector<4x256xi1>, vector<4x256xf32>
    %c16_i32_49 = arith.constant 16 : i32
    %174 = tpu.dynamic_rotate %168 by %c16_i32_49 dim 1 : vector<4x256xf32>, i32 -> vector<4x256xf32>
    %175 = arith.maximumf %173, %174 : vector<4x256xf32>
    %176 = vector.shape_cast %31 : vector<1x256xi1> to vector<1x256xi1>
    %177 = vector.broadcast %176 : vector<1x256xi1> to vector<4x256xi1>
    %178 = arith.select %177, %175, %173 : vector<4x256xi1>, vector<4x256xf32>
    %c240_i32_50 = arith.constant 240 : i32
    %179 = tpu.dynamic_rotate %168 by %c240_i32_50 dim 1 : vector<4x256xf32>, i32 -> vector<4x256xf32>
    %180 = arith.maximumf %178, %179 : vector<4x256xf32>
    %181 = vector.shape_cast %45 : vector<1x256xi1> to vector<1x256xi1>
    %182 = vector.broadcast %181 : vector<1x256xi1> to vector<4x256xi1>
    %183 = arith.select %182, %180, %178 : vector<4x256xi1>, vector<4x256xf32>
    %c224_i32_51 = arith.constant 224 : i32
    %184 = tpu.dynamic_rotate %168 by %c224_i32_51 dim 1 : vector<4x256xf32>, i32 -> vector<4x256xf32>
    %185 = arith.maximumf %183, %184 : vector<4x256xf32>
    %186 = vector.shape_cast %59 : vector<1x256xi1> to vector<1x256xi1>
    %187 = vector.broadcast %186 : vector<1x256xi1> to vector<4x256xi1>
    %188 = arith.select %187, %185, %183 : vector<4x256xi1>, vector<4x256xf32>
    %c0_52 = arith.constant 0 : index
    %c0_53 = arith.constant 0 : index
    %c0_54 = arith.constant 0 : index
    %c0_55 = arith.constant 0 : index
    %189 = vector.load %arg4[%c0_52, %c0_53, %c0_54, %c0_55] : memref<1x4x4x256xf32, #tpu.memory_space<vmem>>, vector<1x1x4x256xf32>
    %190 = vector.shape_cast %189 : vector<1x1x4x256xf32> to vector<4x256xf32>
    %191 = vector.shape_cast %188 : vector<4x256xf32> to vector<1x1x4x256xf32>
    tpu.vector_store %arg4[%c0_52, %c0_53, %c0_54, %c0_55], %191 {strides = array<i32>} : memref<1x4x4x256xf32, #tpu.memory_space<vmem>>, vector<1x1x4x256xf32>,
    return
  }
  func.func @transform_0(%arg0: i32, %arg1: i32) -> (i32, i32) {
    %c0_i32 = arith.constant 0 : i32
    %c0_i32_0 = arith.constant 0 : i32
    %c0_i32_1 = arith.constant 0 : i32
    return %c0_i32, %c0_i32_0 : i32, i32
  }
  func.func @transform_1(%arg0: i32, %arg1: i32) -> (i32, i32, i32) {
    %c0_i32 = arith.constant 0 : i32
    %c0_i32_0 = arith.constant 0 : i32
    return %arg0, %arg1, %c0_i32 : i32, i32, i32
  }
  func.func @transform_2(%arg0: i32, %arg1: i32) -> (i32, i32, i32, i32) {
    %c0_i32 = arith.constant 0 : i32
    %c0_i32_0 = arith.constant 0 : i32
    %c0_i32_1 = arith.constant 0 : i32
    return %arg0, %c0_i32, %arg1, %c0_i32_0 : i32, i32, i32, i32
  }
}

</mosaic_0001>

<llo_original>
// kernel: spatial_pyramid_pooling.1
$region0: #{spatial_pyramid_pooling.1}
  #allocation0 [shape = 'u32[]', space=smem, size = 0x4, offset = 0x4, fixed_abs, tag = 'smem constant byte address 0x4 - core index']
  #allocation1 [shape = 'u32[144,128]{1,0:T(1,128)}', space=vmem, size = 0x12000, scoped, tag = 'internal scratch']
  %s0 = inlined_call_operand.vmem [shape: s32[2,256], index: 0, kind: input, shape index: {}]
  %s1 = inlined_call_operand.vmem [shape: f32[2,4,256], index: 1, kind: input, shape index: {}]
  %s2 = inlined_call_operand.vmem [shape: f32[2,4,4,256], index: 2, kind: output, shape index: {}]
  %s3 = sld [smem:[#allocation0]]
  $region41: #{spatial_pyramid_pooling.1} parent=0
    _
  %s5 = ssub.s32 1, %s3
  %s6 = scalar_select 0, %s5, %s3
  loop: start=0, step=1, limit=4
  $region2: #{spatial_pyramid_pooling.1} parent=0 // loop_pre_header
    _
  $region3: #{spatial_pyramid_pooling.1} parent=0 // loop_header
    %s8 = sphi 0, %s12
    %p9 = scmp.ge.s32.totalorder %s8, 4
    %s15 = sphi 0, %s27
    %s16 = sphi 0, %s23
    %s17 = sphi 0, %s15
    %s18 = sphi 0, %s16
    %s19 = sphi 0, %s17
    %s20 = sphi 0, %s18
    %s28 = sphi 0, %s28
    %s30 = sphi 0, %s28
    %s31 = sphi 0, %s30
    %s45 = sphi 0, %s31
    %s53 = sphi 0, %s55
    %s56 = sphi 0, %s53
    %s57 = sphi 0, %s56
    %s73 = sphi 0, %s57
    %s81 = sphi 0, %s83
    %s84 = sphi 0, %s81
    %s85 = sphi 0, %s84
    %s101 = sphi 0, %s85
  $region4: #{spatial_pyramid_pooling.1} parent=0 // loop_header_branch
    %11 = sbr.rel (%p9) target = $region8
  $region5: #{spatial_pyramid_pooling.1} parent=0 // loop_body
    %s13 = ssub.s32 %s8, 1
    %s14 = ssub.s32 %s8, 2
    %s21 = sadd.s32 1, %s16
    %p22 = scmp.ge.s32.totalorder %s21, 1
    %s23 = scalar_select %p22, 0, %s21
    %s24 = sadd.s32 1, %s15
    %s25 = scalar_select %p22, %s24, %s15
    %p26 = scmp.ge.s32.totalorder %s25, 2
    %s27 = scalar_select %p26, 0, %s25
    %s29 = sadd.s32 %s28, 1
    %p32 = scmp.eq.s32.totalorder %s8, 1
    %p33 = scmp.ne.s32.totalorder %s28, %s30
    %p34 = scmp.eq.s32.totalorder %s8, 0
    %p35 = por %p33, %p34
    %p36 = scmp.ne.s32.totalorder %s28, %s30
    %p37 = scmp.eq.s32.totalorder %s13, 1
    %p38 = por %p36, %p37
    %p39 = scmp.ne.s32.totalorder %s30, %s31
    %p40 = scmp.eq.s32.totalorder %s13, 0
    %p41 = por %p39, %p40
    %p42 = scmp.ne.s32.totalorder %s30, %s31
    %p43 = scmp.eq.s32.totalorder %s14, 1
    %p44 = por %p42, %p43
    %p46 = scmp.ne.s32.totalorder %s31, %s45
    %p47 = scmp.eq.s32.totalorder %s14, 0
    %p48 = por %p46, %p47
    %s49 = ssub.s32 %s15, %s27
    %s50 = ssub.s32 %s16, %s23
    %s51 = sor.u32 %s49, %s50
    %p52 = scmp.eq.s32.totalorder %s51, 0
    %s54 = sadd.s32 %s53, 1
    %s55 = scalar_select %p52, %s53, %s54
    %p58 = pneg %p52
    %p59 = scmp.eq.s32.totalorder %s8, 1
    %p60 = por %p58, %p59
    %p61 = scmp.ne.s32.totalorder %s53, %s56
    %p62 = scmp.eq.s32.totalorder %s8, 0
    %p63 = por %p61, %p62
    %p64 = scmp.ne.s32.totalorder %s53, %s56
    %p65 = scmp.eq.s32.totalorder %s13, 1
    %p66 = por %p64, %p65
    %p67 = scmp.ne.s32.totalorder %s56, %s57
    %p68 = scmp.eq.s32.totalorder %s13, 0
    %p69 = por %p67, %p68
    %p70 = scmp.ne.s32.totalorder %s56, %s57
    %p71 = scmp.eq.s32.totalorder %s14, 1
    %p72 = por %p70, %p71
    %p74 = scmp.ne.s32.totalorder %s57, %s73
    %p75 = scmp.eq.s32.totalorder %s14, 0
    %p76 = por %p74, %p75
    %s77 = ssub.s32 %s15, %s27
    %s78 = ssub.s32 %s16, %s23
    %s79 = sor.u32 %s77, %s78
    %p80 = scmp.eq.s32.totalorder %s79, 0
    %s82 = sadd.s32 %s81, 1
    %s83 = scalar_select %p80, %s81, %s82
    %p86 = pneg %p80
    %p87 = scmp.eq.s32.totalorder %s8, 1
    %p88 = por %p86, %p87
    %p89 = scmp.ne.s32.totalorder %s81, %s84
    %p90 = scmp.eq.s32.totalorder %s8, 0
    %p91 = por %p89, %p90
    %p92 = scmp.ne.s32.totalorder %s81, %s84
    %p93 = scmp.eq.s32.totalorder %s13, 1
    %p94 = por %p92, %p93
    %p95 = scmp.ne.s32.totalorder %s84, %s85
    %p96 = scmp.eq.s32.totalorder %s13, 0
    %p97 = por %p95, %p96
    %p98 = scmp.ne.s32.totalorder %s84, %s85
    %p99 = scmp.eq.s32.totalorder %s14, 1
    %p100 = por %p98, %p99
    %p102 = scmp.ne.s32.totalorder %s85, %s101
    %p103 = scmp.eq.s32.totalorder %s14, 0
    %p104 = por %p102, %p103
    %p105 = scmp.le.s32.totalorder 1, %s8
    %p106 = scmp.lt.s32.totalorder %s8, 3
    %p107 = pnand %p105, %p106
    %p108 = pneg %p107
    // Predicated region
    $region9: #{spatial_pyramid_pooling.1} parent=5 // pred_check
      _
    $region10: #{spatial_pyramid_pooling.1} parent=5 // pred_check_branch
      %110 = sbr.rel (%p107) target = $region12
    $region11: #{spatial_pyramid_pooling.1} parent=5 // pred_region
      %s111 = ssub.s32 %s8, 1
      // Predicated region
      $region13: #{spatial_pyramid_pooling.1} parent=11 // pred_check
        %p112 = pneg %p41
      $region14: #{spatial_pyramid_pooling.1} parent=11 // pred_check_branch
        %114 = sbr.rel (%p112) target = $region16
      $region15: #{spatial_pyramid_pooling.1} parent=11 // pred_region
        _
      $region16: #{spatial_pyramid_pooling.1} parent=11 // pred_fallthru
        _
    $region12: #{spatial_pyramid_pooling.1} parent=5 // pred_fallthru
      _
    %p115 = scmp.lt.s32.totalorder %s8, 2
    // Predicated region
    $region17: #{spatial_pyramid_pooling.1} parent=5 // pred_check
      %p116 = pneg %p115
    $region18: #{spatial_pyramid_pooling.1} parent=5 // pred_check_branch
      %118 = sbr.rel (%p116) target = $region20
    $region19: #{spatial_pyramid_pooling.1} parent=5 // pred_region
      // Predicated region
      $region21: #{spatial_pyramid_pooling.1} parent=19 // pred_check
        %p119 = pneg %p63
      $region22: #{spatial_pyramid_pooling.1} parent=19 // pred_check_branch
        %121 = sbr.rel (%p119) target = $region24
      $region23: #{spatial_pyramid_pooling.1} parent=19 // pred_region
        %p122 = scmp.lt.s32.totalorder %s15, 1
        %s123 = scalar_select %p122, %s15, 1
        %p124 = scmp.lt.s32.totalorder %s16, 0
        %s125 = scalar_select %p124, %s16, 0
        %s126 = smul.addr %s125, 2
        %s127 = smul.addr %s123, 2
        %s128 = sadd.s32 %s126, %s127
        %s129 = smul.addr %s128, 4
        %s130 = scalar_lea.vmem %s1, %s129
      $region24: #{spatial_pyramid_pooling.1} parent=19 // pred_fallthru
        _
    $region20: #{spatial_pyramid_pooling.1} parent=5 // pred_fallthru
      _
    %p131 = scmp.le.s32.totalorder 1, %s8
    %p132 = scmp.lt.s32.totalorder %s8, 3
    %p133 = pnand %p131, %p132
    %p134 = pneg %p133
    // Predicated region
    $region25: #{spatial_pyramid_pooling.1} parent=5 // pred_check
      _
    $region26: #{spatial_pyramid_pooling.1} parent=5 // pred_check_branch
      %136 = sbr.rel (%p133) target = $region28
    $region27: #{spatial_pyramid_pooling.1} parent=5 // pred_region
      %s137 = ssub.s32 %s8, 1
      %p138 = pneg %p41
      %p139 = pneg %p38
      %p140 = scmp.lt.s32.totalorder %s17, 1
      %s141 = scalar_select %p140, %s17, 1
      %p142 = scmp.lt.s32.totalorder %s18, 0
      %s143 = scalar_select %p142, %s18, 0
      %s144 = smul.addr %s143, 2
      %s145 = smul.addr %s141, 2
      %s146 = sadd.s32 %s144, %s145
      %s147 = smul.addr %s146, 4
      %s148 = scalar_lea.vmem %s1, %s147
      %p149 = pneg %p69
      %p150 = pneg %p66
      %p151 = pneg %p97
      %p152 = pneg %p94
      %p153 = scmp.lt.s32.totalorder %s17, 1
      %s154 = scalar_select %p153, %s17, 1
      %p155 = scmp.lt.s32.totalorder %s18, 0
      %s156 = scalar_select %p155, %s18, 0
      %s157 = smul.addr %s156, 2
      %s158 = smul.addr %s154, 8
      %s159 = sadd.s32 %s157, %s158
      %s160 = smul.addr %s159, 4
      %s161 = scalar_lea.vmem %s2, %s160
      %p162 = scmp.lt.s32.totalorder %s17, 1
      %s163 = scalar_select %p162, %s17, 1
      %p164 = scmp.lt.s32.totalorder %s18, 0
      %s165 = scalar_select %p164, %s18, 0
      %s166 = smul.addr %s165, 2
      %s167 = smul.addr %s163, 2
      %s168 = sadd.s32 %s166, %s167
      %s169 = smul.addr %s168, 4
      %s170 = scalar_lea.vmem %s1, %s169
      %p171 = scmp.lt.s32.totalorder %s17, 1
      %s172 = scalar_select %p171, %s17, 1
      %p173 = scmp.lt.s32.totalorder %s18, 0
      %s174 = scalar_select %p173, %s18, 0
      %s175 = smul.addr %s174, 2
      %s176 = smul.addr %s172, 8
      %s177 = sadd.s32 %s175, %s176
      %s178 = smul.addr %s177, 4
      %s179 = scalar_lea.vmem %s2, %s178
      %v180 = vld [vmem:[%s170] sm:$0xff]
      %v181 = vld [vmem:[%s0] ss:$2 sm:$0x3]
      %s182 = scalar_lea.vmem %s0, 1
      %v183 = vld [vmem:[%s182] ss:$2 sm:$0x3]
      %v184 = vadd.s32 %v181, 4294967294
      %v185 = vadd.s32 %v183, 4294967294
      %vm186 = vcmp.ge.s32.totalorder %v184, 0
      %vm187 = vcmp.lt.s32.totalorder %v184, 16
      %vm188 = vmand %vm186, %vm187
      %vm189 = vcmp.ge.s32.totalorder %v185, 0
      %vm190 = vcmp.lt.s32.totalorder %v185, 16
      %vm191 = vmand %vm189, %vm190
      %v192 = vadd.s32 %v181, 4294967295
      %v193 = vadd.s32 %v183, 4294967295
      %vm194 = vcmp.ge.s32.totalorder %v192, 0
      %vm195 = vcmp.lt.s32.totalorder %v192, 16
      %vm196 = vmand %vm194, %vm195
      %vm197 = vcmp.ge.s32.totalorder %v193, 0
      %vm198 = vcmp.lt.s32.totalorder %v193, 16
      %vm199 = vmand %vm197, %vm198
      %v200 = vadd.s32 %v181, 1
      %v201 = vadd.s32 %v183, 1
      %vm202 = vcmp.ge.s32.totalorder %v200, 0
      %vm203 = vcmp.lt.s32.totalorder %v200, 16
      %vm204 = vmand %vm202, %vm203
      %vm205 = vcmp.ge.s32.totalorder %v201, 0
      %vm206 = vcmp.lt.s32.totalorder %v201, 16
      %vm207 = vmand %vm205, %vm206
      %v208 = vadd.s32 %v181, 2
      %v209 = vadd.s32 %v183, 2
      %vm210 = vcmp.ge.s32.totalorder %v208, 0
      %vm211 = vcmp.lt.s32.totalorder %v208, 16
      %vm212 = vmand %vm210, %vm211
      %vm213 = vcmp.ge.s32.totalorder %v209, 0
      %vm214 = vcmp.lt.s32.totalorder %v209, 16
      %vm215 = vmand %vm213, %vm214
      %s216 = scalar_lea.vmem %s179, 24
      %217 = vst [vmem:[%s216] sm:$0xff] %v180
      %v219 = vcombine.high %v180, %v180
      %221 = vrot.lane.b32.xlu0 %v180, 2
      %v222 = vpop.permute.xlu0 %221
      %223 = vrot.lane.b32.xlu0 %v219, 2
      %v224 = vpop.permute.xlu0 %223
      %v225 = vlaneseq
      %v226 = vand.u32 %v225, 127
      %vm227 = vcmp.lt.s32.totalorder %v226, 2
      %v228 = vsel %vm227, %v222, %v224
      %v229 = vsel %vm227, %v224, %v222
      %v232 = vcombine.low %v229, %v228
      %v234 = vmax.f32 %v180, %v232
      %v235 = vsel %vm188, 1, 0
      %v236 = vlaneseq
      %v237 = vshrl.u32 %v236, 7
      %v238 = vsub.s32 0, %v237
      %v239 = vrot.slane %v235, %v238
      %v240 = vlaneseq
      %v241 = vshrl.u32 %v240, 7
      %v242 = vsub.s32 1, %v241
      %v243 = vrot.slane %v235, %v242
      %vm244 = vcmp.eq.s32.totalorder %v239, 1
      %vm245 = vcmp.eq.s32.totalorder %v243, 1
      %v247 = vcombine.high %v234, %v234
      %v249 = vsel %vm244, %v234, %v180
      %v250 = vsel %vm245, %v247, %v219
      %251 = vrot.lane.b32.xlu0 %v180, 1
      %v252 = vpop.permute.xlu0 %251
      %253 = vrot.lane.b32.xlu0 %v219, 1
      %v254 = vpop.permute.xlu0 %253
      %vm255 = vcmp.lt.s32.totalorder %v226, 1
      %v256 = vsel %vm255, %v252, %v254
      %v257 = vsel %vm255, %v254, %v252
      %v258 = vmax.f32 %v249, %v257
      %v259 = vmax.f32 %v250, %v256
      %v260 = vsel %vm196, 1, 0
      %v261 = vlaneseq
      %v262 = vshrl.u32 %v261, 7
      %v263 = vsub.s32 0, %v262
      %v264 = vrot.slane %v260, %v263
      %v265 = vlaneseq
      %v266 = vshrl.u32 %v265, 7
      %v267 = vsub.s32 1, %v266
      %v268 = vrot.slane %v260, %v267
      %vm269 = vcmp.eq.s32.totalorder %v264, 1
      %vm270 = vcmp.eq.s32.totalorder %v268, 1
      %v271 = vsel %vm269, %v258, %v249
      %v272 = vsel %vm270, %v259, %v250
      %273 = vrot.lane.b32.xlu0 %v180, 127
      %v274 = vpop.permute.xlu0 %273
      %275 = vrot.lane.b32.xlu0 %v219, 127
      %v276 = vpop.permute.xlu0 %275
      %vm277 = vcmp.lt.s32.totalorder %v226, 127
      %v278 = vsel %vm277, %v274, %v276
      %v279 = vsel %vm277, %v276, %v274
      %v280 = vmax.f32 %v271, %v278
      %v281 = vmax.f32 %v272, %v279
      %v282 = vsel %vm204, 1, 0
      %v283 = vlaneseq
      %v284 = vshrl.u32 %v283, 7
      %v285 = vsub.s32 0, %v284
      %v286 = vrot.slane %v282, %v285
      %v287 = vlaneseq
      %v288 = vshrl.u32 %v287, 7
      %v289 = vsub.s32 1, %v288
      %v290 = vrot.slane %v282, %v289
      %vm291 = vcmp.eq.s32.totalorder %v286, 1
      %vm292 = vcmp.eq.s32.totalorder %v290, 1
      %v293 = vsel %vm291, %v280, %v271
      %v294 = vsel %vm292, %v281, %v272
      %295 = vrot.lane.b32.xlu0 %v180, 126
      %v296 = vpop.permute.xlu0 %295
      %297 = vrot.lane.b32.xlu0 %v219, 126
      %v298 = vpop.permute.xlu0 %297
      %vm299 = vcmp.lt.s32.totalorder %v226, 126
      %v300 = vsel %vm299, %v296, %v298
      %v301 = vsel %vm299, %v298, %v296
      %v302 = vmax.f32 %v293, %v300
      %v303 = vmax.f32 %v294, %v301
      %v304 = vsel %vm212, 1, 0
      %v305 = vlaneseq
      %v306 = vshrl.u32 %v305, 7
      %v307 = vsub.s32 0, %v306
      %v308 = vrot.slane %v304, %v307
      %v309 = vlaneseq
      %v310 = vshrl.u32 %v309, 7
      %v311 = vsub.s32 1, %v310
      %v312 = vrot.slane %v304, %v311
      %vm313 = vcmp.eq.s32.totalorder %v308, 1
      %vm314 = vcmp.eq.s32.totalorder %v312, 1
      %v315 = vsel %vm313, %v302, %v293
      %v316 = vsel %vm314, %v303, %v294
      %317 = vrot.lane.b32.xlu0 %v315, 32
      %v318 = vpop.permute.xlu0 %317
      %319 = vrot.lane.b32.xlu0 %v316, 32
      %v320 = vpop.permute.xlu0 %319
      %vm321 = vcmp.lt.s32.totalorder %v226, 32
      %v322 = vsel %vm321, %v318, %v320
      %v323 = vsel %vm321, %v320, %v318
      %v324 = vmax.f32 %v315, %v323
      %v325 = vmax.f32 %v316, %v322
      %v326 = vsel %vm191, 1, 0
      %v327 = vlaneseq
      %v328 = vshrl.u32 %v327, 7
      %v329 = vsub.s32 0, %v328
      %v330 = vrot.slane %v326, %v329
      %v331 = vlaneseq
      %v332 = vshrl.u32 %v331, 7
      %v333 = vsub.s32 1, %v332
      %v334 = vrot.slane %v326, %v333
      %vm335 = vcmp.eq.s32.totalorder %v330, 1
      %vm336 = vcmp.eq.s32.totalorder %v334, 1
      %v337 = vsel %vm335, %v324, %v315
      %v338 = vsel %vm336, %v325, %v316
      %339 = vrot.lane.b32.xlu0 %v315, 16
      %v340 = vpop.permute.xlu0 %339
      %341 = vrot.lane.b32.xlu0 %v316, 16
      %v342 = vpop.permute.xlu0 %341
      %vm343 = vcmp.lt.s32.totalorder %v226, 16
      %v344 = vsel %vm343, %v340, %v342
      %v345 = vsel %vm343, %v342, %v340
      %v346 = vmax.f32 %v337, %v345
      %v347 = vmax.f32 %v338, %v344
      %v348 = vsel %vm199, 1, 0
      %v349 = vlaneseq
      %v350 = vshrl.u32 %v349, 7
      %v351 = vsub.s32 0, %v350
      %v352 = vrot.slane %v348, %v351
      %v353 = vlaneseq
      %v354 = vshrl.u32 %v353, 7
      %v355 = vsub.s32 1, %v354
      %v356 = vrot.slane %v348, %v355
      %vm357 = vcmp.eq.s32.totalorder %v352, 1
      %vm358 = vcmp.eq.s32.totalorder %v356, 1
      %v359 = vsel %vm357, %v346, %v337
      %v360 = vsel %vm358, %v347, %v338
      %361 = vrot.lane.b32.xlu0 %v315, 112
      %v362 = vpop.permute.xlu0 %361
      %363 = vrot.lane.b32.xlu0 %v316, 112
      %v364 = vpop.permute.xlu0 %363
      %vm365 = vcmp.lt.s32.totalorder %v226, 112
      %v366 = vsel %vm365, %v362, %v364
      %v367 = vsel %vm365, %v364, %v362
      %v368 = vmax.f32 %v359, %v366
      %v369 = vmax.f32 %v360, %v367
      %v370 = vsel %vm207, 1, 0
      %v371 = vlaneseq
      %v372 = vshrl.u32 %v371, 7
      %v373 = vsub.s32 0, %v372
      %v374 = vrot.slane %v370, %v373
      %v375 = vlaneseq
      %v376 = vshrl.u32 %v375, 7
      %v377 = vsub.s32 1, %v376
      %v378 = vrot.slane %v370, %v377
      %vm379 = vcmp.eq.s32.totalorder %v374, 1
      %vm380 = vcmp.eq.s32.totalorder %v378, 1
      %v381 = vsel %vm379, %v368, %v359
      %v382 = vsel %vm380, %v369, %v360
      %383 = vrot.lane.b32.xlu0 %v315, 96
      %v384 = vpop.permute.xlu0 %383
      %385 = vrot.lane.b32.xlu0 %v316, 96
      %v386 = vpop.permute.xlu0 %385
      %vm387 = vcmp.lt.s32.totalorder %v226, 96
      %v388 = vsel %vm387, %v384, %v386
      %v389 = vsel %vm387, %v386, %v384
      %v390 = vmax.f32 %v381, %v388
      %v391 = vmax.f32 %v382, %v389
      %v392 = vsel %vm215, 1, 0
      %v393 = vlaneseq
      %v394 = vshrl.u32 %v393, 7
      %v395 = vsub.s32 0, %v394
      %v396 = vrot.slane %v392, %v395
      %v397 = vlaneseq
      %v398 = vshrl.u32 %v397, 7
      %v399 = vsub.s32 1, %v398
      %v400 = vrot.slane %v392, %v399
      %vm401 = vcmp.eq.s32.totalorder %v396, 1
      %vm402 = vcmp.eq.s32.totalorder %v400, 1
      %v403 = vsel %vm401, %v390, %v381
      %v404 = vsel %vm402, %v391, %v382
      %v407 = vcombine.low %v403, %v404
      %s409 = scalar_lea.vmem %s179, 16
      %410 = vst [vmem:[%s409] sm:$0xff] %v407
      %411 = vrot.lane.b32.xlu0 %v403, 2
      %v412 = vpop.permute.xlu0 %411
      %413 = vrot.lane.b32.xlu0 %v404, 2
      %v414 = vpop.permute.xlu0 %413
      %v415 = vsel %vm227, %v412, %v414
      %v416 = vsel %vm227, %v414, %v412
      %v417 = vmax.f32 %v403, %v416
      %v418 = vmax.f32 %v404, %v415
      %v419 = vsel %vm244, %v417, %v403
      %v420 = vsel %vm245, %v418, %v404
      %421 = vrot.lane.b32.xlu0 %v403, 1
      %v422 = vpop.permute.xlu0 %421
      %423 = vrot.lane.b32.xlu0 %v404, 1
      %v424 = vpop.permute.xlu0 %423
      %v425 = vsel %vm255, %v422, %v424
      %v426 = vsel %vm255, %v424, %v422
      %v427 = vmax.f32 %v419, %v426
      %v428 = vmax.f32 %v420, %v425
      %v429 = vsel %vm269, %v427, %v419
      %v430 = vsel %vm270, %v428, %v420
      %431 = vrot.lane.b32.xlu0 %v403, 127
      %v432 = vpop.permute.xlu0 %431
      %433 = vrot.lane.b32.xlu0 %v404, 127
      %v434 = vpop.permute.xlu0 %433
      %v435 = vsel %vm277, %v432, %v434
      %v436 = vsel %vm277, %v434, %v432
      %v437 = vmax.f32 %v429, %v435
      %v438 = vmax.f32 %v430, %v436
      %v439 = vsel %vm291, %v437, %v429
      %v440 = vsel %vm292, %v438, %v430
      %441 = vrot.lane.b32.xlu0 %v403, 126
      %v442 = vpop.permute.xlu0 %441
      %443 = vrot.lane.b32.xlu0 %v404, 126
      %v444 = vpop.permute.xlu0 %443
      %v445 = vsel %vm299, %v442, %v444
      %v446 = vsel %vm299, %v444, %v442
      %v447 = vmax.f32 %v439, %v445
      %v448 = vmax.f32 %v440, %v446
      %v449 = vsel %vm313, %v447, %v439
      %v450 = vsel %vm314, %v448, %v440
      %451 = vrot.lane.b32.xlu0 %v449, 32
      %v452 = vpop.permute.xlu0 %451
      %453 = vrot.lane.b32.xlu0 %v450, 32
      %v454 = vpop.permute.xlu0 %453
      %v455 = vsel %vm321, %v452, %v454
      %v456 = vsel %vm321, %v454, %v452
      %v457 = vmax.f32 %v449, %v456
      %v458 = vmax.f32 %v450, %v455
      %v459 = vsel %vm335, %v457, %v449
      %v460 = vsel %vm336, %v458, %v450
      %461 = vrot.lane.b32.xlu0 %v449, 16
      %v462 = vpop.permute.xlu0 %461
      %463 = vrot.lane.b32.xlu0 %v450, 16
      %v464 = vpop.permute.xlu0 %463
      %v465 = vsel %vm343, %v462, %v464
      %v466 = vsel %vm343, %v464, %v462
      %v467 = vmax.f32 %v459, %v466
      %v468 = vmax.f32 %v460, %v465
      %v469 = vsel %vm357, %v467, %v459
      %v470 = vsel %vm358, %v468, %v460
      %471 = vrot.lane.b32.xlu0 %v449, 112
      %v472 = vpop.permute.xlu0 %471
      %473 = vrot.lane.b32.xlu0 %v450, 112
      %v474 = vpop.permute.xlu0 %473
      %v475 = vsel %vm365, %v472, %v474
      %v476 = vsel %vm365, %v474, %v472
      %v477 = vmax.f32 %v469, %v475
      %v478 = vmax.f32 %v470, %v476
      %v479 = vsel %vm379, %v477, %v469
      %v480 = vsel %vm380, %v478, %v470
      %481 = vrot.lane.b32.xlu0 %v449, 96
      %v482 = vpop.permute.xlu0 %481
      %483 = vrot.lane.b32.xlu0 %v450, 96
      %v484 = vpop.permute.xlu0 %483
      %v485 = vsel %vm387, %v482, %v484
      %v486 = vsel %vm387, %v484, %v482
      %v487 = vmax.f32 %v479, %v485
      %v488 = vmax.f32 %v480, %v486
      %v489 = vsel %vm401, %v487, %v479
      %v490 = vsel %vm402, %v488, %v480
      %v493 = vcombine.low %v489, %v490
      %s495 = scalar_lea.vmem %s179, 8
      %496 = vst [vmem:[%s495] sm:$0xff] %v493
      %497 = vrot.lane.b32.xlu0 %v489, 2
      %v498 = vpop.permute.xlu0 %497
      %499 = vrot.lane.b32.xlu0 %v490, 2
      %v500 = vpop.permute.xlu0 %499
      %v501 = vsel %vm227, %v498, %v500
      %v502 = vsel %vm227, %v500, %v498
      %v503 = vmax.f32 %v489, %v502
      %v504 = vmax.f32 %v490, %v501
      %v505 = vsel %vm244, %v503, %v489
      %v506 = vsel %vm245, %v504, %v490
      %507 = vrot.lane.b32.xlu0 %v489, 1
      %v508 = vpop.permute.xlu0 %507
      %509 = vrot.lane.b32.xlu0 %v490, 1
      %v510 = vpop.permute.xlu0 %509
      %v511 = vsel %vm255, %v508, %v510
      %v512 = vsel %vm255, %v510, %v508
      %v513 = vmax.f32 %v505, %v512
      %v514 = vmax.f32 %v506, %v511
      %v515 = vsel %vm269, %v513, %v505
      %v516 = vsel %vm270, %v514, %v506
      %517 = vrot.lane.b32.xlu0 %v489, 127
      %v518 = vpop.permute.xlu0 %517
      %519 = vrot.lane.b32.xlu0 %v490, 127
      %v520 = vpop.permute.xlu0 %519
      %v521 = vsel %vm277, %v518, %v520
      %v522 = vsel %vm277, %v520, %v518
      %v523 = vmax.f32 %v515, %v521
      %v524 = vmax.f32 %v516, %v522
      %v525 = vsel %vm291, %v523, %v515
      %v526 = vsel %vm292, %v524, %v516
      %527 = vrot.lane.b32.xlu0 %v489, 126
      %v528 = vpop.permute.xlu0 %527
      %529 = vrot.lane.b32.xlu0 %v490, 126
      %v530 = vpop.permute.xlu0 %529
      %v531 = vsel %vm299, %v528, %v530
      %v532 = vsel %vm299, %v530, %v528
      %v533 = vmax.f32 %v525, %v531
      %v534 = vmax.f32 %v526, %v532
      %v535 = vsel %vm313, %v533, %v525
      %v536 = vsel %vm314, %v534, %v526
      %537 = vrot.lane.b32.xlu0 %v535, 32
      %v538 = vpop.permute.xlu0 %537
      %539 = vrot.lane.b32.xlu0 %v536, 32
      %v540 = vpop.permute.xlu0 %539
      %v541 = vsel %vm321, %v538, %v540
      %v542 = vsel %vm321, %v540, %v538
      %v543 = vmax.f32 %v535, %v542
      %v544 = vmax.f32 %v536, %v541
      %v545 = vsel %vm335, %v543, %v535
      %v546 = vsel %vm336, %v544, %v536
      %547 = vrot.lane.b32.xlu0 %v535, 16
      %v548 = vpop.permute.xlu0 %547
      %549 = vrot.lane.b32.xlu0 %v536, 16
      %v550 = vpop.permute.xlu0 %549
      %v551 = vsel %vm343, %v548, %v550
      %v552 = vsel %vm343, %v550, %v548
      %v553 = vmax.f32 %v545, %v552
      %v554 = vmax.f32 %v546, %v551
      %v555 = vsel %vm357, %v553, %v545
      %v556 = vsel %vm358, %v554, %v546
      %557 = vrot.lane.b32.xlu0 %v535, 112
      %v558 = vpop.permute.xlu0 %557
      %559 = vrot.lane.b32.xlu0 %v536, 112
      %v560 = vpop.permute.xlu0 %559
      %v561 = vsel %vm365, %v558, %v560
      %v562 = vsel %vm365, %v560, %v558
      %v563 = vmax.f32 %v555, %v561
      %v564 = vmax.f32 %v556, %v562
      %v565 = vsel %vm379, %v563, %v555
      %v566 = vsel %vm380, %v564, %v556
      %567 = vrot.lane.b32.xlu0 %v535, 96
      %v568 = vpop.permute.xlu0 %567
      %569 = vrot.lane.b32.xlu0 %v536, 96
      %v570 = vpop.permute.xlu0 %569
      %v571 = vsel %vm387, %v568, %v570
      %v572 = vsel %vm387, %v570, %v568
      %v573 = vmax.f32 %v565, %v571
      %v574 = vmax.f32 %v566, %v572
      %v575 = vsel %vm401, %v573, %v565
      %v576 = vsel %vm402, %v574, %v566
      %v579 = vcombine.low %v575, %v576
      %581 = vst [vmem:[%s179] sm:$0xff] %v579
      %p582 = scmp.lt.s32.totalorder %s17, 1
      %s583 = scalar_select %p582, %s17, 1
      %p584 = scmp.lt.s32.totalorder %s18, 0
      %s585 = scalar_select %p584, %s18, 0
      %s586 = smul.addr %s585, 2
      %s587 = smul.addr %s583, 8
      %s588 = sadd.s32 %s586, %s587
      %s589 = smul.addr %s588, 4
      %s590 = scalar_lea.vmem %s2, %s589
      // Predicated region
      $region29: #{spatial_pyramid_pooling.1} parent=27 // pred_check
        %p591 = pneg %p94
      $region30: #{spatial_pyramid_pooling.1} parent=27 // pred_check_branch
        %593 = sbr.rel (%p591) target = $region32
      $region31: #{spatial_pyramid_pooling.1} parent=27 // pred_region
        _
      $region32: #{spatial_pyramid_pooling.1} parent=27 // pred_fallthru
        _
    $region28: #{spatial_pyramid_pooling.1} parent=5 // pred_fallthru
      _
    %p594 = scmp.le.s32.totalorder 2, %s8
    // Predicated region
    $region33: #{spatial_pyramid_pooling.1} parent=5 // pred_check
      %p595 = pneg %p594
    $region34: #{spatial_pyramid_pooling.1} parent=5 // pred_check_branch
      %597 = sbr.rel (%p595) target = $region36
    $region35: #{spatial_pyramid_pooling.1} parent=5 // pred_region
      %s598 = ssub.s32 %s8, 2
      // Predicated region
      $region37: #{spatial_pyramid_pooling.1} parent=35 // pred_check
        %p599 = pneg %p100
      $region38: #{spatial_pyramid_pooling.1} parent=35 // pred_check_branch
        %601 = sbr.rel (%p599) target = $region40
      $region39: #{spatial_pyramid_pooling.1} parent=35 // pred_region
        %p602 = scmp.lt.s32.totalorder %s19, 1
        %s603 = scalar_select %p602, %s19, 1
        %p604 = scmp.lt.s32.totalorder %s20, 0
        %s605 = scalar_select %p604, %s20, 0
        %s606 = smul.addr %s605, 2
        %s607 = smul.addr %s603, 8
        %s608 = sadd.s32 %s606, %s607
        %s609 = smul.addr %s608, 4
        %s610 = scalar_lea.vmem %s2, %s609
      $region40: #{spatial_pyramid_pooling.1} parent=35 // pred_fallthru
        _
    $region36: #{spatial_pyramid_pooling.1} parent=5 // pred_fallthru
      _
  $region6: #{spatial_pyramid_pooling.1} parent=0 // loop_footer
    %s12 = sadd.s32 1, %s8
  $region7: #{spatial_pyramid_pooling.1} parent=0 // loop_footer_branch
    %7 = sbr.rel target = $region3
  $region8: #{spatial_pyramid_pooling.1} parent=0 // loop_exit
    _

</llo_original>
